<compile_context>
chip_gen: v5e
topology: v5e:2x2
jax: 0.10.0
libtpu: 0.0.40
codegen_flags: <defaults>
</compile_context>

<pallas_src>
import numpy as np
import jax
import jax.numpy as jnp
from jax.experimental import pallas as pl
from jax.experimental.pallas import tpu as pltpu


def _round_up(x, m):
    return ((x + m - 1) // m) * m


# --------------------------------------------------------------------------- #
# Conv1d(kernel=3, padding=1, stride) + LeakyReLU(0.2): one matmul over B*t_out #
# --------------------------------------------------------------------------- #
def _conv_lrelu_kernel(cols_ref, w_ref, b_ref, o_ref):
    # cols_ref: (K, TN)   im2col tile, K = 3*Cin, columns = (b, t) positions
    # w_ref:    (Cout, K) flattened conv weight
    # b_ref:    (Cout, 1) bias
    # o_ref:    (Cout, TN)
    acc = jnp.dot(w_ref[...], cols_ref[...], preferred_element_type=jnp.float32)
    acc = acc + b_ref[...]
    o_ref[...] = jnp.where(acc >= 0.0, acc, 0.2 * acc)


def conv1d_lrelu(a, w, b, stride):
    """a: (Cin, B, L) f32; w: (Cout, Cin, 3); b: (Cout,) -> (Cout, B, t_out)."""
    Cin, B, L = a.shape
    Cout = w.shape[0]
    t_out = (L - 1) // stride + 1
    a_pad = jnp.pad(a, ((0, 0), (0, 0), (1, 1)))
    # im2col (glue): cols[k*Cin + c, b, t] = a_pad[c, b, t*stride + k]
    cols = jnp.concatenate(
        [a_pad[:, :, k::stride][:, :, :t_out] for k in range(3)], axis=0)
    K = 3 * Cin
    N = B * t_out
    Np0 = _round_up(N, 128)
    TN = min(512, Np0)                      # lane tile (multiple of 128)
    Np = _round_up(N, TN)
    cols_p = jnp.pad(cols.reshape(K, N), ((0, 0), (0, Np - N)))
    w_mat = jnp.transpose(w, (0, 2, 1)).reshape(Cout, K)   # [co, k*Cin + c]
    b_col = b.reshape(Cout, 1)

    y_p = pl.pallas_call(
        _conv_lrelu_kernel,
        out_shape=jax.ShapeDtypeStruct((Cout, Np), jnp.float32),
        grid=(Np // TN,),
        in_specs=[
            pl.BlockSpec((K, TN), lambda i: (0, i)),
            pl.BlockSpec((Cout, K), lambda i: (0, 0)),
            pl.BlockSpec((Cout, 1), lambda i: (0, 0)),
        ],
        out_specs=pl.BlockSpec((Cout, TN), lambda i: (0, i)),
        compiler_params=pltpu.CompilerParams(
            dimension_semantics=("parallel",)),
    )(cols_p, w_mat, b_col)
    return y_p[:, :N].reshape(Cout, B, t_out)


# --------------------------------------------------------------------------- #
# Noise-synthesis tail: mod_sigmoid + amp_to_impulse_response + fft_convolve   #
# --------------------------------------------------------------------------- #
def build_noise_operators(noise_bands, target_size, lane=128):
    """Dense operators for the tail.

    Returns (MF2, F2, G, TSp, NFp):
      MF2: (NB, 2*NFp)  f32   rfft of the (irfft + roll + hann + pad + roll) impulse response
                              per amplitude bin:  U = amp @ MF2
      F2 : (TSp, 2*NFp) bf16  stacked [cos | sin] length-2TS rfft basis for the noise signal
      G  : (2*NFp, TSp) bf16  output irfft basis at samples [TS, 2TS) with the kernel's
                              left-pad parity (-1)^k already folded in.
    """
    NB, TS = noise_bands, target_size
    FS = 2 * (NB - 1)          # filter_size produced by irfft
    L = 2 * TS                 # fft_convolve transform length
    NF = TS + 1                # rfft bins
    TSp = _round_up(TS, lane)
    NFp = _round_up(NF, lane)

    # amp (NB real rfft bins) -> windowed, rolled impulse response of length TS
    t = np.arange(FS)[:, None]
    k = np.arange(NB)[None, :]
    wk = np.where((k == 0) | (k == NB - 1), 1.0, 2.0)
    IC = wk * np.cos(2.0 * np.pi * k * t / FS) / FS            # irfft of real spectrum
    IC = IC[(np.arange(FS) - FS // 2) % FS]                    # roll(+FS//2)
    hann = 0.5 - 0.5 * np.cos(2.0 * np.pi * np.arange(FS) / FS)
    IC = hann[:, None] * IC                                    # hann window
    ICp = np.zeros((TS, NB))
    ICp[:FS] = IC                                              # pad to target_size
    ICp = ICp[(np.arange(TS) + FS // 2) % TS]                  # roll(-FS//2)
    M = ICp.T                                                  # (NB, TS)

    # shared rfft basis over samples [0, TS) (signal is right-padded with zeros to 2TS)
    v = np.arange(TS)[:, None]
    kk = np.arange(NF)[None, :]
    C = np.cos(2.0 * np.pi * v * kk / L)                       # (TS, NF)
    Sn = np.sin(2.0 * np.pi * v * kk / L)
    F2 = np.zeros((TSp, 2 * NFp), np.float32)
    F2[:TS, :NF] = C
    F2[:TS, NFp:NFp + NF] = Sn

    # Fused operator: rfft of the impulse response directly from the amplitudes.
    MF2 = np.zeros((NB, 2 * NFp), np.float32)
    MF2[:, :NF] = M @ C
    MF2[:, NFp:NFp + NF] = M @ Sn

    # Output irfft basis restricted to samples [TS, 2TS).  The kernel is left-padded by TS,
    # so K_rfft[f] = (-1)^f * (uc - i*us); cos/sin(2*pi*f*(TS+tau)/L) = (-1)^f * cos/sin(...tau),
    # and the two parities cancel: G is the plain irfft basis evaluated at tau in [0, TS).
    kcol = np.arange(NF)[:, None]
    tau = np.arange(TS)[None, :]
    wf = np.where((kcol == 0) | (kcol == TS), 1.0, 2.0)
    G = np.zeros((2 * NFp, TSp), np.float32)
    G[:NF, :TS] = wf * np.cos(2.0 * np.pi * kcol * tau / L) / L
    G[NFp:NFp + NF, :TS] = wf * np.sin(2.0 * np.pi * kcol * tau / L) / L

    return (jnp.asarray(MF2, jnp.float32),
            jnp.asarray(F2, jnp.bfloat16),
            jnp.asarray(G, jnp.bfloat16),
            TSp, NFp)


def _noise_synth_kernel(x_ref, noise_ref, mf2_ref, f2_ref, g_ref, o_ref):
    # x_ref:     (TR, NB)          pre-sigmoid conv3 amplitudes, one row per (b, t, d)
    # noise_ref: (TR, TSp)    bf16 uniform noise in [-1, 1), zero-padded to TSp lanes
    # mf2_ref:   (NB, 2*NFp)  f32  fused (impulse-response -> rfft) operator
    # f2_ref:    (TSp, 2*NFp) bf16 stacked [cos | sin] rfft basis for the noise
    # g_ref:     (2*NFp, TSp) bf16 stacked output irfft basis
    # o_ref:     (TR, TSp)    f32
    nfp = g_ref.shape[0] // 2
    x = x_ref[...]
    # mod_sigmoid(x - 5) = 2*sigmoid(x-5)**2.3 + 1e-7 via softplus (no -inf intermediates)
    y = 5.0 - x
    softplus = jnp.maximum(y, 0.0) + jnp.log(1.0 + jnp.exp(-jnp.abs(y)))
    amp = 2.0 * jnp.exp(-2.3 * softplus) + 1e-7

    U = jnp.dot(amp, mf2_ref[...], preferred_element_type=jnp.float32)        # kernel rfft
    S = jnp.dot(noise_ref[...], f2_ref[...], preferred_element_type=jnp.float32)  # signal rfft
    sc, ss = S[:, :nfp], S[:, nfp:]          # signal rfft:  S = sc - i*ss
    uc, us = U[:, :nfp], U[:, nfp:]          # kernel rfft:  K = (-1)^f * (uc - i*us)
    A = sc * uc - ss * us
    B = sc * us + ss * uc
    P = jnp.concatenate([A, B], axis=-1).astype(jnp.bfloat16)                 # (TR, 2*NFp)
    o_ref[...] = jnp.dot(P, g_ref[...], preferred_element_type=jnp.float32)


def noise_synthesizer_forward(x, params, ratios, out_dim, noise_bands, noise):
    """x: (B, in_dim, L); noise: (B, T, out_dim, prod(ratios)) uniform in [-1, 1)."""
    (w1, b1), (w2, b2), (w3, b3) = params
    a = jnp.transpose(x, (1, 0, 2))                     # (Cin, B, L) conv layout
    a = conv1d_lrelu(a, w1, b1, ratios[0])
    a = conv1d_lrelu(a, w2, b2, ratios[1])
    a = conv1d_lrelu(a, w3, b3, ratios[2])              # (out_dim*NB, B, T)
    _, B, T = a.shape
    D, NB = out_dim, noise_bands
    TS = int(np.prod(ratios))
    R = B * T * D

    # rows[(b*T+t)*D + d, n] = conv3_out[b, d*NB+n, t]  (tiny glue vs. the TS-wide tail)
    rows = jnp.transpose(a, (1, 2, 0)).reshape(R, NB)

    MF2, F2, G, TSp, NFp = build_noise_operators(NB, TS)

    TR = 256 if R >= 256 else _round_up(R, 8)           # row tile
    Rp = _round_up(R, TR)
    rows_p = jnp.pad(rows, ((0, Rp - R), (0, 0)))
    noise_p = jnp.pad(noise.reshape(R, TS).astype(jnp.bfloat16),
                      ((0, Rp - R), (0, TSp - TS)))

    out_p = pl.pallas_call(
        _noise_synth_kernel,
        out_shape=jax.ShapeDtypeStruct((Rp, TSp), jnp.float32),
        grid=(Rp // TR,),
        in_specs=[
            pl.BlockSpec((TR, NB), lambda i: (i, 0)),
            pl.BlockSpec((TR, TSp), lambda i: (i, 0)),
            pl.BlockSpec((NB, 2 * NFp), lambda i: (0, 0)),       # VMEM-resident operators
            pl.BlockSpec((TSp, 2 * NFp), lambda i: (0, 0)),
            pl.BlockSpec((2 * NFp, TSp), lambda i: (0, 0)),
        ],
        out_specs=pl.BlockSpec((TR, TSp), lambda i: (i, 0)),
        compiler_params=pltpu.CompilerParams(
            dimension_semantics=("parallel",),
            vmem_limit_bytes=32 * 1024 * 1024),
    )(rows_p, noise_p, MF2, F2, G)

    out = out_p[:R, :TS].reshape(B, T, D, TS)
    # fft_convolve(noise, ir).permute(0, 2, 1, 3).reshape(B, out_dim, -1)
    return jnp.transpose(out, (0, 2, 1, 3)).reshape(B, D, T * TS)


# --------------------------------------------------------------------------- #
# Pure-JAX reference (uses jnp.fft) to validate the Pallas implementation      #
# --------------------------------------------------------------------------- #
def reference_forward(x, params, ratios, out_dim, noise_bands, noise):
    (w1, b1), (w2, b2), (w3, b3) = params

    def conv_lrelu_ref(h, w, b, s):
        y = jax.lax.conv_general_dilated(
            h, w, window_strides=(s,), padding=((1, 1),),
            dimension_numbers=("NCH", "OIH", "NCH"))
        y = y + b[None, :, None]
        return jnp.where(y >= 0, y, 0.2 * y)

    h = conv_lrelu_ref(x, w1, b1, ratios[0])
    h = conv_lrelu_ref(h, w2, b2, ratios[1])
    h = conv_lrelu_ref(h, w3, b3, ratios[2])
    B, _, T = h.shape
    D, NB = out_dim, noise_bands
    TS = int(np.prod(ratios))
    FS = 2 * (NB - 1)

    amp = 2.0 * jax.nn.sigmoid(h - 5.0) ** 2.3 + 1e-7
    amp = jnp.transpose(amp, (0, 2, 1)).reshape(B, T, D, NB)
    ir = jnp.fft.irfft(amp.astype(jnp.complex64), n=FS, axis=-1)
    ir = jnp.roll(ir, FS // 2, axis=-1)
    win = 0.5 - 0.5 * jnp.cos(2.0 * jnp.pi * jnp.arange(FS) / FS)
    ir = ir * win
    ir = jnp.pad(ir, ((0, 0), (0, 0), (0, 0), (0, TS - FS)))
    ir = jnp.roll(ir, -(FS // 2), axis=-1)
    sig = jnp.pad(noise, ((0, 0), (0, 0), (0, 0), (0, TS)))
    ker = jnp.pad(ir, ((0, 0), (0, 0), (0, 0), (TS, 0)))
    out = jnp.fft.irfft(jnp.fft.rfft(sig) * jnp.fft.rfft(ker), n=2 * TS, axis=-1)
    out = out[..., TS:]
    return jnp.transpose(out, (0, 2, 1, 3)).reshape(B, D, T * TS)


# --------------------------------------------------------------------------- #
if __name__ == "__main__":
    B, in_dim, L = 2, 16, 32
    out_dim, noise_bands = 2, 3
    ratios = [2, 2, 2]
    TS = int(np.prod(ratios))

    key = jax.random.PRNGKey(0)
    kx, kn, *kw = jax.random.split(key, 10)

    def init_conv(k_w, k_b, cout, cin):
        bound = 1.0 / np.sqrt(cin * 3)
        w = jax.random.uniform(k_w, (cout, cin, 3), jnp.float32, -bound, bound)
        b = jax.random.uniform(k_b, (cout,), jnp.float32, -bound, bound)
        return w, b

    p1 = init_conv(kw[0], kw[1], in_dim, in_dim)
    p2 = init_conv(kw[2], kw[3], in_dim, in_dim)
    p3 = init_conv(kw[4], kw[5], out_dim * noise_bands, in_dim)
    params = (p1, p2, p3)

    x = jax.random.normal(kx, (B, in_dim, L), jnp.float32)

    # sequence length after the three strided convs
    T = L
    for r in ratios:
        T = (T - 1) // r + 1
    # TODO(synk): torch.rand_like RNG cannot be matched bit-for-bit; the uniform noise in
    # [-1, 1) is generated host-side with jax.random and fed to both kernel and reference.
    noise = jax.random.uniform(kn, (B, T, out_dim, TS), jnp.float32) * 2.0 - 1.0

    out = noise_synthesizer_forward(x, params, ratios, out_dim, noise_bands, noise)
    out = jax.block_until_ready(out)

    ref = reference_forward(x, params, ratios, out_dim, noise_bands, noise)
    ref = jax.block_until_ready(ref)
    np.testing.assert_allclose(np.asarray(out), np.asarray(ref), rtol=2e-2, atol=2e-2)

    print("KERNEL_OK")
</pallas_src>

<mosaic_0001>
module attributes {stable_mosaic.version = 11 : i64} {
  func.func @_conv_lrelu_kernel(%arg0: i32, %arg1: memref<48x128xf32, #tpu.memory_space<vmem>>, %arg2: memref<16x48xf32, #tpu.memory_space<vmem>>, %arg3: memref<16x1xf32, #tpu.memory_space<vmem>>, %arg4: memref<16x128xf32, #tpu.memory_space<vmem>>) attributes {dimension_semantics = [#tpu.dimension_semantics<parallel>], iteration_bounds = array<i64: 1>, scalar_prefetch = 0 : i64, scratch_operands = 0 : i64, tpu.core_type = #tpu.core_type<tc>, window_params = [{transform_indices = @transform_0, window_bounds = array<i64: 48, 128>}, {pipeline_mode = #tpu.pipeline_mode<synchronous>, transform_indices = @transform_1, window_bounds = array<i64: 16, 48>}, {pipeline_mode = #tpu.pipeline_mode<synchronous>, transform_indices = @transform_2, window_bounds = array<i64: 16, 1>}, {transform_indices = @transform_3, window_bounds = array<i64: 16, 128>}]} {
    %c0 = arith.constant 0 : index
    %c0_0 = arith.constant 0 : index
    %0 = vector.load %arg2[%c0, %c0_0] : memref<16x48xf32, #tpu.memory_space<vmem>>, vector<16x48xf32>
    %c0_1 = arith.constant 0 : index
    %c0_2 = arith.constant 0 : index
    %1 = vector.load %arg1[%c0_1, %c0_2] : memref<48x128xf32, #tpu.memory_space<vmem>>, vector<48x128xf32>
    %cst = arith.constant dense<0.000000e+00> : vector<16x128xf32>
    %2 = tpu.matmul %0, %1, %cst {dimension_numbers = #tpu.dot_dimension_numbers<[1], [0], [0], [1], [0, 0, 1, 1], [], []>} : vector<16x48xf32>, vector<48x128xf32>, vector<16x128xf32> -> vector<16x128xf32>
    %c0_3 = arith.constant 0 : index
    %c0_4 = arith.constant 0 : index
    %3 = vector.load %arg3[%c0_3, %c0_4] : memref<16x1xf32, #tpu.memory_space<vmem>>, vector<16x1xf32>
    %4 = vector.broadcast %3 : vector<16x1xf32> to vector<16x128xf32>
    %5 = arith.addf %2, %4 : vector<16x128xf32>
    %cst_5 = arith.constant 0.000000e+00 : f32
    %6 = vector.broadcast %cst_5 : f32 to vector<16x128xf32>
    %7 = arith.cmpf oge, %5, %6 : vector<16x128xf32>
    %cst_6 = arith.constant 2.000000e-01 : f32
    %8 = vector.broadcast %cst_6 : f32 to vector<16x128xf32>
    %9 = arith.mulf %8, %5 : vector<16x128xf32>
    %10 = arith.select %7, %5, %9 : vector<16x128xi1>, vector<16x128xf32>
    %c0_7 = arith.constant 0 : index
    %c0_8 = arith.constant 0 : index
    %11 = vector.load %arg4[%c0_7, %c0_8] : memref<16x128xf32, #tpu.memory_space<vmem>>, vector<16x128xf32>
    tpu.vector_store %arg4[%c0_7, %c0_8], %10 {strides = array<i32>} : memref<16x128xf32, #tpu.memory_space<vmem>>, vector<16x128xf32>,
    return
  }
  func.func @transform_0(%arg0: i32) -> (i32, i32) {
    %c0_i32 = arith.constant 0 : i32
    %c0_i32_0 = arith.constant 0 : i32
    return %c0_i32, %arg0 : i32, i32
  }
  func.func @transform_1(%arg0: i32) -> (i32, i32) {
    %c0_i32 = arith.constant 0 : i32
    %c0_i32_0 = arith.constant 0 : i32
    %c0_i32_1 = arith.constant 0 : i32
    return %c0_i32, %c0_i32_0 : i32, i32
  }
  func.func @transform_2(%arg0: i32) -> (i32, i32) {
    %c0_i32 = arith.constant 0 : i32
    %c0_i32_0 = arith.constant 0 : i32
    %c0_i32_1 = arith.constant 0 : i32
    return %c0_i32, %c0_i32_0 : i32, i32
  }
  func.func @transform_3(%arg0: i32) -> (i32, i32) {
    %c0_i32 = arith.constant 0 : i32
    %c0_i32_0 = arith.constant 0 : i32
    return %c0_i32, %arg0 : i32, i32
  }
}

</mosaic_0001>

<llo_original>
// kernel: tpu_custom_call.1
$region0: #{tpu_custom_call.1}
  #allocation0 [shape = 'u32[]', space=smem, size = 0x4, offset = 0x4, fixed_abs, tag = 'smem constant byte address 0x4 - core index']
  #allocation1 [shape = 'u32[72,128]{1,0:T(1,128)}', space=vmem, size = 0x9000, scoped, tag = 'internal scratch']
  %s0 = inlined_call_operand.hbm [shape: f32[48,128], index: 0, kind: input, shape index: {}]
  %s1 = inlined_call_operand.vmem [shape: f32[16,48], index: 1, kind: input, shape index: {}]
  %s2 = inlined_call_operand.vmem [shape: f32[16,1], index: 2, kind: input, shape index: {}]
  %s3 = inlined_call_operand.hbm [shape: f32[16,128], index: 3, kind: output, shape index: {}]
  %s4 = sld [smem:[#allocation0]]
  $region26: #{tpu_custom_call.1} parent=0
    _
  %s6 = ssub.s32 1, %s4
  %s7 = scalar_select 0, %s6, %s4
  $region1: #{tpu_custom_call.1} parent=0
    #allocation2 [shape = 'u8[24576]{0}', space=vmem, size = 0x6000, scoped, tag = 'input window, operand 0, single buffered']
    #allocation3 [shape = 's32[1]{0}', space=sflag, size = 0x4, scoped, tag = 'scoped memory for tpu_custom_call.1']
    #allocation4 [shape = 's32[1]{0}', space=sflag, size = 0x4, scoped, tag = 'scoped memory for tpu_custom_call.1']
    #allocation5 [shape = 'u8[8192]{0}', space=vmem, size = 0x2000, scoped, tag = 'output window, operand 0, single buffered']
    %8 = vsyncpa [#allocation3], 0
    %9 = vsyncpa [#allocation4], 0
    // Predicated region
    $region2: #{tpu_custom_call.1} parent=1 // pred_check
      _
    $region3: #{tpu_custom_call.1} parent=1 // pred_check_branch
      %11 = sbr.rel (0) target = $region5
    $region4: #{tpu_custom_call.1} parent=1 // pred_region
      %13 = vsyncadd [#allocation3], 0
      %s14 = sshll.u32 %s0, 4
      %s15 = int_to_ptr.hbm [resolvable:$true] %s14
      %s16 = sshll.u32 [#allocation2], 4
      %s17 = int_to_ptr.vmem [resolvable:$true] %s16
      %22 = dma.hbm_to_vmem [thread:$0]  %s15, 768, %s17, [#allocation3], 128, 128, 8
    $region5: #{tpu_custom_call.1} parent=1 // pred_fallthru
      _
    // Predicated region
    $region6: #{tpu_custom_call.1} parent=1 // pred_check
      _
    $region7: #{tpu_custom_call.1} parent=1 // pred_check_branch
      %24 = sbr.rel (0) target = $region9
    $region8: #{tpu_custom_call.1} parent=1 // pred_region
      _
    $region9: #{tpu_custom_call.1} parent=1 // pred_fallthru
      _
    // Predicated region
    $region10: #{tpu_custom_call.1} parent=1 // pred_check
      _
    $region11: #{tpu_custom_call.1} parent=1 // pred_check_branch
      %26 = sbr.rel (0) target = $region13
    $region12: #{tpu_custom_call.1} parent=1 // pred_region
      _
    $region13: #{tpu_custom_call.1} parent=1 // pred_fallthru
      _
    // Predicated region
    $region14: #{tpu_custom_call.1} parent=1 // pred_check
      _
    $region15: #{tpu_custom_call.1} parent=1 // pred_check_branch
      %28 = sbr.rel (0) target = $region17
    $region16: #{tpu_custom_call.1} parent=1 // pred_region
      %30 = dma.done [#allocation3], 768
    $region17: #{tpu_custom_call.1} parent=1 // pred_fallthru
      _
    %v31 = vld [vmem:[%s1] sm:$0xff]
    %v32 = vld [vmem:[%s1 + $0x8] sm:$0xff]
    %v33 = vld [vmem:[#allocation2] sm:$0xff]
    %v34 = vld [vmem:[#allocation2 + $0x8] sm:$0xff]
    %v35 = vld [vmem:[#allocation2 + $0x10] sm:$0xff]
    %v36 = vld [vmem:[#allocation2 + $0x18] sm:$0xff]
    %v37 = vld [vmem:[#allocation2 + $0x20] sm:$0xff]
    %v38 = vld [vmem:[#allocation2 + $0x28] sm:$0xff]
    %v39 = vld [vmem:[%s2] sm:$0xff]
    %v40 = vld [vmem:[%s2 + $0x8] sm:$0xff]
    %42 = vset.pattern.permute.xlu0 0
    %43 = vperm.xlu0 %42, %v39
    %v44 = vpop.permute.xlu0 %43
    %47 = vset.pattern.permute.xlu0 0
    %48 = vperm.xlu0 %47, %v40
    %v49 = vpop.permute.xlu0 %48
    %vm51 = vcmask 392192
    %v53 = vsel %vm51, %v31, 0
    %v56 = vsel %vm51, %v32, 0
    %58 = vmatpush.msra.mxu0 0.0
    %59 = vmatpush.msra.mxu0 0.0
    %60 = vmatpush.msra.mxu0 0.0
    %61 = vmatpush.msra.mxu0 0.0
    %62 = vmatpush.msra.mxu0 0.0
    %63 = vmatpush.msra.mxu0 0.0
    %64 = vmatpush.msra.mxu0 0.0
    %65 = vmatpush.msra.mxu0 0.0
    %66 = vmatpush.msra.mxu0 0.0
    %67 = vmatpush.msra.mxu0 0.0
    %68 = vmatpush.msra.mxu0 %v38
    %69 = vmatpush.msra.mxu0 %v37
    %70 = vmatpush.msra.mxu0 %v36
    %71 = vmatpush.msra.mxu0 %v35
    %72 = vmatpush.msra.mxu0 %v34
    %73 = vmatpush.msra.mxu0 %v33
    %74 = vmatmul.f32.gmra.mxu0 %v53
    %v75 = vpop.f32.mrf.mxu0
    %v76 = vadd.f32 %v44, %v75
    %77 = vmatmul.f32.gmra.mxu0 %v56
    %v78 = vpop.f32.mrf.mxu0
    %v79 = vadd.f32 %v49, %v78
    %80 = vdwg.mxu0
    %vm81 = vcmp.ge.f32.partialorder %v76, 0.0
    %vm82 = vcmp.ge.f32.partialorder %v79, 0.0
    %v83 = vmul.f32 %v76, 0.2
    %v84 = vmul.f32 %v79, 0.2
    %v85 = vsel %vm81, %v76, %v83
    %v86 = vsel %vm82, %v79, %v84
    %87 = vst [vmem:[#allocation5] sm:$0xff] %v85
    %88 = vst [vmem:[#allocation5 + $0x8] sm:$0xff] %v86
    // Predicated region
    $region18: #{tpu_custom_call.1} parent=1 // pred_check
      _
    $region19: #{tpu_custom_call.1} parent=1 // pred_check_branch
      %90 = sbr.rel (0) target = $region21
    $region20: #{tpu_custom_call.1} parent=1 // pred_region
      %92 = vsyncadd [#allocation4], 0
      %s93 = sshll.u32 [#allocation5], 4
      %s94 = int_to_ptr.vmem [resolvable:$true] %s93
      %s95 = sshll.u32 %s3, 4
      %s96 = int_to_ptr.hbm [resolvable:$true] %s95
      %101 = dma.vmem_to_hbm [thread:$0]  %s94, 256, %s96, [#allocation4], 128, 128, 8
    $region21: #{tpu_custom_call.1} parent=1 // pred_fallthru
      _
    // Predicated region
    $region22: #{tpu_custom_call.1} parent=1 // pred_check
      _
    $region23: #{tpu_custom_call.1} parent=1 // pred_check_branch
      %103 = sbr.rel (0) target = $region25
    $region24: #{tpu_custom_call.1} parent=1 // pred_region
      %105 = dma.done [#allocation4], 256
    $region25: #{tpu_custom_call.1} parent=1 // pred_fallthru
      _
    %106 = vsyncpa [#allocation3], 1
    %107 = vsyncpa [#allocation4], 1

</llo_original>
